<compile_context>
chip_gen: v7x
topology: tpu7x:2x2x1
jax: 0.10.0
libtpu: 0.0.40
codegen_flags: <defaults>
</compile_context>

<pallas_src>
import jax
import jax.numpy as jnp
from jax.experimental import pallas as pl
from jax.experimental.pallas import tpu as pltpu

# ----------------------------- model dims (small) -----------------------------
BATCH = 8
INPUT_SIZE = 64        # decoder vocab (embedding rows)
EMBED_SIZE = 32
HIDDEN_SIZE = 32
OUTPUT_SIZE = 64       # len(english.vocab) stand-in
NUM_LAYERS = 2
P_DROPOUT = 0.5        # identity in eval mode

# lane-padded gate/logit width (multiple of 128 lanes)
CPAD = ((max(4 * HIDDEN_SIZE, OUTPUT_SIZE) + 127) // 128) * 128   # 128


# ------------------------------- Pallas kernel --------------------------------
def decoder_kernel(ids_ref,                      # scalar-prefetch: [T*B] int32 (SMEM)
                   table0_ref, w_ref, b_ref,     # weights (VMEM-resident, loaded once)
                   h0_ref, c0_ref,               # initial state
                   pred_ref, hout_ref, cout_ref, # outputs
                   h_sc, c_sc):                  # VMEM scratch: recurrent state carry
    H = HIDDEN_SIZE
    t = pl.program_id(0)

    # ---- step 0: bring the initial recurrent state into the VMEM carry ----
    @pl.when(t == 0)
    def _():
        h_sc[...] = h0_ref[...]
        c_sc[...] = c0_ref[...]

    # ---- one-hot(ids[t]) built from SMEM scalars (pure VALU, no relayout) ----
    # TODO(synk): out-of-range token ids silently produce a zero embedding row
    #             (PyTorch nn.Embedding would raise); validate ids in the wrapper.
    base = t * BATCH
    row_iota = jax.lax.broadcasted_iota(jnp.int32, (BATCH, INPUT_SIZE), 0)
    vocab_iota = jax.lax.broadcasted_iota(jnp.int32, (BATCH, INPUT_SIZE), 1)
    onehot = jnp.zeros((BATCH, INPUT_SIZE), jnp.float32)
    for b in range(BATCH):                       # static unroll, B=8
        idv = ids_ref[base + b]                  # SMEM scalar read
        onehot = jnp.where((row_iota == b) & (vocab_iota == idv), 1.0, onehot)
    onehot = onehot.astype(jnp.bfloat16)         # [B, V] bf16 MXU operand

    b_all = b_ref[...]                           # [3, CPAD] f32

    def gate_bands(gates):
        # full-vreg EUP ops (one sigmoid + one tanh over all 128 lanes), then extract
        # the 32-lane bands; PyTorch LSTM gate order is (i, f, g, o).
        sig = jax.nn.sigmoid(gates)
        tnh = jnp.tanh(gates)
        i = sig[:, 0 * H:1 * H]
        f = sig[:, 1 * H:2 * H]
        g = tnh[:, 2 * H:3 * H]
        o = sig[:, 3 * H:4 * H]
        return i, f, g, o

    # ---- layer 0: gates = onehot @ (emb @ W_ih0) + h0 @ W_hh0 + b0 ----
    h_prev0 = h_sc[0]
    c_prev0 = c_sc[0]
    g0 = (jnp.dot(onehot, table0_ref[...], preferred_element_type=jnp.float32)
          + jnp.dot(h_prev0.astype(jnp.bfloat16), w_ref[0],
                    preferred_element_type=jnp.float32)
          + b_all[0:1, :])                       # [B, CPAD] f32
    i0, f0, gg0, o0 = gate_bands(g0)
    c1 = f0 * c_prev0 + i0 * gg0                 # f32 elementwise (v5e-safe)
    h1 = o0 * jnp.tanh(c1)

    # inter-layer dropout: identity (eval mode)

    # ---- layer 1: two independent K=32 matmuls (no concat/pad copies) ----
    h_prev1 = h_sc[1]
    c_prev1 = c_sc[1]
    g1 = (jnp.dot(h1.astype(jnp.bfloat16), w_ref[1], preferred_element_type=jnp.float32)
          + jnp.dot(h_prev1.astype(jnp.bfloat16), w_ref[2],
                    preferred_element_type=jnp.float32)
          + b_all[1:2, :])
    i1, f1, gg1, o1 = gate_bands(g1)
    c2 = f1 * c_prev1 + i1 * gg1
    h2 = o1 * jnp.tanh(c2)

    # ---- carry recurrent state in VMEM scratch (never spilled to HBM mid-decode) ----
    h_sc[0] = h1
    h_sc[1] = h2
    c_sc[0] = c1
    c_sc[1] = c2

    # ---- output linear; lane-dense [B, CPAD]=[8,128] store (wrapper slices cols) ----
    pred_ref[0] = (jnp.dot(h2.astype(jnp.bfloat16), w_ref[3],
                           preferred_element_type=jnp.float32)
                   + b_all[2:3, :])

    # ---- final-step writeback of the recurrent state ----
    @pl.when(t == pl.num_programs(0) - 1)
    def _():
        hout_ref[...] = h_sc[...]
        cout_ref[...] = c_sc[...]


# --------------------------------- wrappers ------------------------------------
def decoder_decode(ids_tb, hidden, cell, kp):
    """Run T teacher-forced decoder steps in ONE pallas_call.

    ids_tb: [T, B] int32; hidden/cell: [L, B, H] f32.
    Returns (preds [T, B, OUTPUT_SIZE], hidden [L, B, H], cell [L, B, H]).
    """
    T = ids_tb.shape[0]
    ids_flat = ids_tb.astype(jnp.int32).reshape(-1)          # 1-D SMEM-friendly layout

    grid_spec = pltpu.PrefetchScalarGridSpec(
        num_scalar_prefetch=1,
        grid=(T,),
        in_specs=[
            # weights: constant block index across T -> single DMA, VMEM-resident
            pl.BlockSpec((INPUT_SIZE, CPAD), lambda t, ids: (0, 0)),
            pl.BlockSpec((4, HIDDEN_SIZE, CPAD), lambda t, ids: (0, 0, 0)),
            pl.BlockSpec((3, CPAD), lambda t, ids: (0, 0)),
            pl.BlockSpec((NUM_LAYERS, BATCH, HIDDEN_SIZE), lambda t, ids: (0, 0, 0)),
            pl.BlockSpec((NUM_LAYERS, BATCH, HIDDEN_SIZE), lambda t, ids: (0, 0, 0)),
        ],
        out_specs=(
            pl.BlockSpec((1, BATCH, CPAD), lambda t, ids: (t, 0, 0)),
            pl.BlockSpec((NUM_LAYERS, BATCH, HIDDEN_SIZE), lambda t, ids: (0, 0, 0)),
            pl.BlockSpec((NUM_LAYERS, BATCH, HIDDEN_SIZE), lambda t, ids: (0, 0, 0)),
        ),
        scratch_shapes=[
            pltpu.VMEM((NUM_LAYERS, BATCH, HIDDEN_SIZE), jnp.float32),   # h carry
            pltpu.VMEM((NUM_LAYERS, BATCH, HIDDEN_SIZE), jnp.float32),   # c carry
        ],
    )

    pred_pad, h_out, c_out = pl.pallas_call(
        decoder_kernel,
        out_shape=(
            jax.ShapeDtypeStruct((T, BATCH, CPAD), jnp.float32),
            jax.ShapeDtypeStruct((NUM_LAYERS, BATCH, HIDDEN_SIZE), jnp.float32),
            jax.ShapeDtypeStruct((NUM_LAYERS, BATCH, HIDDEN_SIZE), jnp.float32),
        ),
        grid_spec=grid_spec,
        compiler_params=pltpu.CompilerParams(
            dimension_semantics=("arbitrary",)),   # time axis has a true recurrence
    )(ids_flat, kp["table0"], kp["w"], kp["b"], hidden, cell)

    return pred_pad[:, :, :OUTPUT_SIZE], h_out, c_out


def decoder_forward(x_ids, hidden, cell, kp):
    """One decoder step (== PyTorch Decoder.forward). x_ids: [B] int32."""
    pred, h_out, c_out = decoder_decode(x_ids.reshape(1, BATCH), hidden, cell, kp)
    return pred[0], h_out, c_out


decoder_forward_jit = jax.jit(decoder_forward)
decoder_decode_jit = jax.jit(decoder_decode)


# --------------------------- deterministic params ------------------------------
def init_params(key):
    """Logical (PyTorch-equivalent) f32 params; W_ih/W_hh pre-transposed to [in, 4H]."""
    ks = jax.random.split(key, 12)
    bound = 1.0 / jnp.sqrt(HIDDEN_SIZE)

    def u(k, shape, b=bound):
        return jax.random.uniform(k, shape, jnp.float32, -b, b)

    return {
        "embedding": jax.random.normal(ks[0], (INPUT_SIZE, EMBED_SIZE), jnp.float32),
        "wih0": u(ks[1], (EMBED_SIZE, 4 * HIDDEN_SIZE)),
        "whh0": u(ks[2], (HIDDEN_SIZE, 4 * HIDDEN_SIZE)),
        "b0":   u(ks[3], (1, 4 * HIDDEN_SIZE)) + u(ks[4], (1, 4 * HIDDEN_SIZE)),  # b_ih + b_hh
        "wih1": u(ks[5], (HIDDEN_SIZE, 4 * HIDDEN_SIZE)),
        "whh1": u(ks[6], (HIDDEN_SIZE, 4 * HIDDEN_SIZE)),
        "b1":   u(ks[7], (1, 4 * HIDDEN_SIZE)) + u(ks[8], (1, 4 * HIDDEN_SIZE)),
        "wlin": u(ks[9], (HIDDEN_SIZE, OUTPUT_SIZE)),
        "blin": u(ks[10], (1, OUTPUT_SIZE)),
    }


def pack_params(p):
    """One-time repack for the kernel:
       * fold embedding into layer 0: table0 = embedding @ W_ih0 (exact: dropout is
         identity in eval mode), kept lane-padded to CPAD;
       * W_hh0 / W_ih1 / W_hh1 / W_lin stacked into one [4, H, CPAD] bf16 slab;
       * biases b0 / b1 / blin stacked into one [3, CPAD] f32 slab."""
    def padc(w):
        out = jnp.zeros((w.shape[0], CPAD), jnp.float32)
        return out.at[:, :w.shape[1]].set(w)

    table0 = padc(p["embedding"] @ p["wih0"]).astype(jnp.bfloat16)      # [V, CPAD]
    w_slab = jnp.stack([padc(p["whh0"]), padc(p["wih1"]),
                        padc(p["whh1"]), padc(p["wlin"])]).astype(jnp.bfloat16)
    b_slab = jnp.stack([padc(p["b0"])[0], padc(p["b1"])[0], padc(p["blin"])[0]])

    return {"table0": table0, "w": w_slab, "b": b_slab}


# ------------------------------ pure-JAX reference ------------------------------
def decoder_ref(x_ids, hidden, cell, p):
    emb = p["embedding"][x_ids]

    def cell_fn(x, h, c, wih, whh, b):
        g = x @ wih + h @ whh + b
        H = HIDDEN_SIZE
        i = jax.nn.sigmoid(g[:, 0*H:1*H]); f = jax.nn.sigmoid(g[:, 1*H:2*H])
        gg = jnp.tanh(g[:, 2*H:3*H]);       o = jax.nn.sigmoid(g[:, 3*H:4*H])
        c_new = f * c + i * gg
        return o * jnp.tanh(c_new), c_new

    h1, c1 = cell_fn(emb, hidden[0], cell[0], p["wih0"], p["whh0"], p["b0"])
    h2, c2 = cell_fn(h1, hidden[1], cell[1], p["wih1"], p["whh1"], p["b1"])
    pred = h2 @ p["wlin"] + p["blin"]
    return pred, jnp.stack([h1, h2]), jnp.stack([c1, c2])


def decoder_ref_decode(ids_tb, hidden, cell, p):
    preds = []
    h, c = hidden, cell
    for t in range(ids_tb.shape[0]):
        pr, h, c = decoder_ref(ids_tb[t], h, c, p)
        preds.append(pr)
    return jnp.stack(preds), h, c


# ------------------------------------ main -------------------------------------
if __name__ == "__main__":
    key = jax.random.PRNGKey(0)
    kparam, kx, kh, kc = jax.random.split(key, 4)

    params = init_params(kparam)
    kparams = pack_params(params)

    T = 8
    ids = jax.random.randint(kx, (T, BATCH), 0, INPUT_SIZE, dtype=jnp.int32)
    hidden = jax.random.normal(kh, (NUM_LAYERS, BATCH, HIDDEN_SIZE), jnp.float32)
    cell = jax.random.normal(kc, (NUM_LAYERS, BATCH, HIDDEN_SIZE), jnp.float32)

    # --- single step (exactly the PyTorch Decoder.forward contract) ---
    pred1, h1, c1 = decoder_forward_jit(ids[0], hidden, cell, kparams)
    jax.block_until_ready((pred1, h1, c1))
    pr1, hr1, cr1 = decoder_ref(ids[0], hidden, cell, params)
    assert jnp.allclose(pred1, pr1, atol=3e-2, rtol=3e-2)
    assert jnp.allclose(h1, hr1, atol=3e-2, rtol=3e-2)
    assert jnp.allclose(c1, cr1, atol=3e-2, rtol=3e-2)

    # --- T-step teacher-forced decode in ONE pallas_call (in-kernel time loop) ---
    preds, hT, cT = decoder_decode_jit(ids, hidden, cell, kparams)
    jax.block_until_ready((preds, hT, cT))
    prs, hrT, crT = decoder_ref_decode(ids, hidden, cell, params)
    # bf16 MXU operands (f32 accumulation) + recurrence over T steps -> looser tol.
    assert jnp.allclose(preds, prs, atol=6e-2, rtol=6e-2)
    assert jnp.allclose(hT, hrT, atol=6e-2, rtol=6e-2)
    assert jnp.allclose(cT, crT, atol=6e-2, rtol=6e-2)

    print("KERNEL_OK")
</pallas_src>

<mosaic_0001>
module attributes {stable_mosaic.version = 11 : i64} {
  func.func @decoder_kernel(%arg0: i32, %arg1: memref<8xi32, #tpu.memory_space<smem>>, %arg2: memref<64x128xbf16, #tpu.memory_space<vmem>>, %arg3: memref<4x32x128xbf16, #tpu.memory_space<vmem>>, %arg4: memref<3x128xf32, #tpu.memory_space<vmem>>, %arg5: memref<2x8x32xf32, #tpu.memory_space<vmem>>, %arg6: memref<2x8x32xf32, #tpu.memory_space<vmem>>, %arg7: memref<1x8x128xf32, #tpu.memory_space<vmem>>, %arg8: memref<2x8x32xf32, #tpu.memory_space<vmem>>, %arg9: memref<2x8x32xf32, #tpu.memory_space<vmem>>, %arg10: memref<2x8x32xf32, #tpu.memory_space<vmem>>, %arg11: memref<2x8x32xf32, #tpu.memory_space<vmem>>) attributes {dimension_semantics = [#tpu.dimension_semantics<arbitrary>], iteration_bounds = array<i64: 1>, scalar_prefetch = 1 : i64, scratch_operands = 2 : i64, tpu.core_type = #tpu.core_type<tc>, window_params = [{pipeline_mode = #tpu.pipeline_mode<synchronous>, transform_indices = @transform_0, window_bounds = array<i64: 64, 128>}, {pipeline_mode = #tpu.pipeline_mode<synchronous>, transform_indices = @transform_1, window_bounds = array<i64: 4, 32, 128>}, {pipeline_mode = #tpu.pipeline_mode<synchronous>, transform_indices = @transform_2, window_bounds = array<i64: 3, 128>}, {pipeline_mode = #tpu.pipeline_mode<synchronous>, transform_indices = @transform_3, window_bounds = array<i64: 2, 8, 32>}, {pipeline_mode = #tpu.pipeline_mode<synchronous>, transform_indices = @transform_4, window_bounds = array<i64: 2, 8, 32>}, {transform_indices = @transform_5, window_bounds = array<i64: 1, 8, 128>}, {pipeline_mode = #tpu.pipeline_mode<synchronous>, transform_indices = @transform_6, window_bounds = array<i64: 2, 8, 32>}, {pipeline_mode = #tpu.pipeline_mode<synchronous>, transform_indices = @transform_7, window_bounds = array<i64: 2, 8, 32>}]} {
    %c0_i32 = arith.constant 0 : i32
    %0 = arith.cmpi eq, %arg0, %c0_i32 : i32
    %1 = arith.extui %0 : i1 to i32
    %c0_i32_0 = arith.constant 0 : i32
    %2 = arith.cmpi ne, %1, %c0_i32_0 : i32
    scf.if %2 {
      %c0_66 = arith.constant 0 : index
      %c0_67 = arith.constant 0 : index
      %c0_68 = arith.constant 0 : index
      %174 = vector.load %arg5[%c0_66, %c0_67, %c0_68] : memref<2x8x32xf32, #tpu.memory_space<vmem>>, vector<2x8x32xf32>
      %c0_69 = arith.constant 0 : index
      %c0_70 = arith.constant 0 : index
      %c0_71 = arith.constant 0 : index
      %175 = vector.load %arg10[%c0_69, %c0_70, %c0_71] : memref<2x8x32xf32, #tpu.memory_space<vmem>>, vector<2x8x32xf32>
      tpu.vector_store %arg10[%c0_69, %c0_70, %c0_71], %174 {strides = array<i32>} : memref<2x8x32xf32, #tpu.memory_space<vmem>>, vector<2x8x32xf32>,
      %c0_72 = arith.constant 0 : index
      %c0_73 = arith.constant 0 : index
      %c0_74 = arith.constant 0 : index
      %176 = vector.load %arg6[%c0_72, %c0_73, %c0_74] : memref<2x8x32xf32, #tpu.memory_space<vmem>>, vector<2x8x32xf32>
      %c0_75 = arith.constant 0 : index
      %c0_76 = arith.constant 0 : index
      %c0_77 = arith.constant 0 : index
      %177 = vector.load %arg11[%c0_75, %c0_76, %c0_77] : memref<2x8x32xf32, #tpu.memory_space<vmem>>, vector<2x8x32xf32>
      tpu.vector_store %arg11[%c0_75, %c0_76, %c0_77], %176 {strides = array<i32>} : memref<2x8x32xf32, #tpu.memory_space<vmem>>, vector<2x8x32xf32>,
    } else {
    }
    %c8_i32 = arith.constant 8 : i32
    %3 = arith.muli %arg0, %c8_i32 : i32
    %4 = tpu.iota {dimensions = array<i32: 0>} : vector<8x64xi32>
    %5 = tpu.iota {dimensions = array<i32: 1>} : vector<8x64xi32>
    %cst = arith.constant 0.000000e+00 : f32
    %6 = vector.broadcast %cst : f32 to vector<8x64xf32>
    %c0_i32_1 = arith.constant 0 : i32
    %7 = arith.addi %3, %c0_i32_1 : i32
    %8 = arith.index_cast %7 : i32 to index
    %9 = memref.load %arg1[%8] : memref<8xi32, #tpu.memory_space<smem>>
    %c0_i32_2 = arith.constant 0 : i32
    %10 = vector.broadcast %c0_i32_2 : i32 to vector<8x64xi32>
    %11 = arith.cmpi eq, %4, %10 : vector<8x64xi32>
    %12 = vector.broadcast %9 : i32 to vector<8x64xi32>
    %13 = arith.cmpi eq, %5, %12 : vector<8x64xi32>
    %14 = arith.andi %11, %13 : vector<8x64xi1>
    %cst_3 = arith.constant 1.000000e+00 : f32
    %15 = vector.broadcast %cst_3 : f32 to vector<8x64xf32>
    %16 = arith.select %14, %15, %6 : vector<8x64xi1>, vector<8x64xf32>
    %c1_i32 = arith.constant 1 : i32
    %17 = arith.addi %3, %c1_i32 : i32
    %18 = arith.index_cast %17 : i32 to index
    %19 = memref.load %arg1[%18] : memref<8xi32, #tpu.memory_space<smem>>
    %c1_i32_4 = arith.constant 1 : i32
    %20 = vector.broadcast %c1_i32_4 : i32 to vector<8x64xi32>
    %21 = arith.cmpi eq, %4, %20 : vector<8x64xi32>
    %22 = vector.broadcast %19 : i32 to vector<8x64xi32>
    %23 = arith.cmpi eq, %5, %22 : vector<8x64xi32>
    %24 = arith.andi %21, %23 : vector<8x64xi1>
    %cst_5 = arith.constant 1.000000e+00 : f32
    %25 = vector.broadcast %cst_5 : f32 to vector<8x64xf32>
    %26 = arith.select %24, %25, %16 : vector<8x64xi1>, vector<8x64xf32>
    %c2_i32 = arith.constant 2 : i32
    %27 = arith.addi %3, %c2_i32 : i32
    %28 = arith.index_cast %27 : i32 to index
    %29 = memref.load %arg1[%28] : memref<8xi32, #tpu.memory_space<smem>>
    %c2_i32_6 = arith.constant 2 : i32
    %30 = vector.broadcast %c2_i32_6 : i32 to vector<8x64xi32>
    %31 = arith.cmpi eq, %4, %30 : vector<8x64xi32>
    %32 = vector.broadcast %29 : i32 to vector<8x64xi32>
    %33 = arith.cmpi eq, %5, %32 : vector<8x64xi32>
    %34 = arith.andi %31, %33 : vector<8x64xi1>
    %cst_7 = arith.constant 1.000000e+00 : f32
    %35 = vector.broadcast %cst_7 : f32 to vector<8x64xf32>
    %36 = arith.select %34, %35, %26 : vector<8x64xi1>, vector<8x64xf32>
    %c3_i32 = arith.constant 3 : i32
    %37 = arith.addi %3, %c3_i32 : i32
    %38 = arith.index_cast %37 : i32 to index
    %39 = memref.load %arg1[%38] : memref<8xi32, #tpu.memory_space<smem>>
    %c3_i32_8 = arith.constant 3 : i32
    %40 = vector.broadcast %c3_i32_8 : i32 to vector<8x64xi32>
    %41 = arith.cmpi eq, %4, %40 : vector<8x64xi32>
    %42 = vector.broadcast %39 : i32 to vector<8x64xi32>
    %43 = arith.cmpi eq, %5, %42 : vector<8x64xi32>
    %44 = arith.andi %41, %43 : vector<8x64xi1>
    %cst_9 = arith.constant 1.000000e+00 : f32
    %45 = vector.broadcast %cst_9 : f32 to vector<8x64xf32>
    %46 = arith.select %44, %45, %36 : vector<8x64xi1>, vector<8x64xf32>
    %c4_i32 = arith.constant 4 : i32
    %47 = arith.addi %3, %c4_i32 : i32
    %48 = arith.index_cast %47 : i32 to index
    %49 = memref.load %arg1[%48] : memref<8xi32, #tpu.memory_space<smem>>
    %c4_i32_10 = arith.constant 4 : i32
    %50 = vector.broadcast %c4_i32_10 : i32 to vector<8x64xi32>
    %51 = arith.cmpi eq, %4, %50 : vector<8x64xi32>
    %52 = vector.broadcast %49 : i32 to vector<8x64xi32>
    %53 = arith.cmpi eq, %5, %52 : vector<8x64xi32>
    %54 = arith.andi %51, %53 : vector<8x64xi1>
    %cst_11 = arith.constant 1.000000e+00 : f32
    %55 = vector.broadcast %cst_11 : f32 to vector<8x64xf32>
    %56 = arith.select %54, %55, %46 : vector<8x64xi1>, vector<8x64xf32>
    %c5_i32 = arith.constant 5 : i32
    %57 = arith.addi %3, %c5_i32 : i32
    %58 = arith.index_cast %57 : i32 to index
    %59 = memref.load %arg1[%58] : memref<8xi32, #tpu.memory_space<smem>>
    %c5_i32_12 = arith.constant 5 : i32
    %60 = vector.broadcast %c5_i32_12 : i32 to vector<8x64xi32>
    %61 = arith.cmpi eq, %4, %60 : vector<8x64xi32>
    %62 = vector.broadcast %59 : i32 to vector<8x64xi32>
    %63 = arith.cmpi eq, %5, %62 : vector<8x64xi32>
    %64 = arith.andi %61, %63 : vector<8x64xi1>
    %cst_13 = arith.constant 1.000000e+00 : f32
    %65 = vector.broadcast %cst_13 : f32 to vector<8x64xf32>
    %66 = arith.select %64, %65, %56 : vector<8x64xi1>, vector<8x64xf32>
    %c6_i32 = arith.constant 6 : i32
    %67 = arith.addi %3, %c6_i32 : i32
    %68 = arith.index_cast %67 : i32 to index
    %69 = memref.load %arg1[%68] : memref<8xi32, #tpu.memory_space<smem>>
    %c6_i32_14 = arith.constant 6 : i32
    %70 = vector.broadcast %c6_i32_14 : i32 to vector<8x64xi32>
    %71 = arith.cmpi eq, %4, %70 : vector<8x64xi32>
    %72 = vector.broadcast %69 : i32 to vector<8x64xi32>
    %73 = arith.cmpi eq, %5, %72 : vector<8x64xi32>
    %74 = arith.andi %71, %73 : vector<8x64xi1>
    %cst_15 = arith.constant 1.000000e+00 : f32
    %75 = vector.broadcast %cst_15 : f32 to vector<8x64xf32>
    %76 = arith.select %74, %75, %66 : vector<8x64xi1>, vector<8x64xf32>
    %c7_i32 = arith.constant 7 : i32
    %77 = arith.addi %3, %c7_i32 : i32
    %78 = arith.index_cast %77 : i32 to index
    %79 = memref.load %arg1[%78] : memref<8xi32, #tpu.memory_space<smem>>
    %c7_i32_16 = arith.constant 7 : i32
    %80 = vector.broadcast %c7_i32_16 : i32 to vector<8x64xi32>
    %81 = arith.cmpi eq, %4, %80 : vector<8x64xi32>
    %82 = vector.broadcast %79 : i32 to vector<8x64xi32>
    %83 = arith.cmpi eq, %5, %82 : vector<8x64xi32>
    %84 = arith.andi %81, %83 : vector<8x64xi1>
    %cst_17 = arith.constant 1.000000e+00 : f32
    %85 = vector.broadcast %cst_17 : f32 to vector<8x64xf32>
    %86 = arith.select %84, %85, %76 : vector<8x64xi1>, vector<8x64xf32>
    %87 = arith.truncf %86 : vector<8x64xf32> to vector<8x64xbf16>
    %c0 = arith.constant 0 : index
    %c0_18 = arith.constant 0 : index
    %88 = vector.load %arg4[%c0, %c0_18] : memref<3x128xf32, #tpu.memory_space<vmem>>, vector<3x128xf32>
    %c0_19 = arith.constant 0 : index
    %c0_20 = arith.constant 0 : index
    %c0_21 = arith.constant 0 : index
    %89 = vector.load %arg10[%c0_19, %c0_20, %c0_21] : memref<2x8x32xf32, #tpu.memory_space<vmem>>, vector<1x8x32xf32>
    %90 = vector.shape_cast %89 : vector<1x8x32xf32> to vector<8x32xf32>
    %c0_22 = arith.constant 0 : index
    %c0_23 = arith.constant 0 : index
    %c0_24 = arith.constant 0 : index
    %91 = vector.load %arg11[%c0_22, %c0_23, %c0_24] : memref<2x8x32xf32, #tpu.memory_space<vmem>>, vector<1x8x32xf32>
    %92 = vector.shape_cast %91 : vector<1x8x32xf32> to vector<8x32xf32>
    %c0_25 = arith.constant 0 : index
    %c0_26 = arith.constant 0 : index
    %93 = vector.load %arg2[%c0_25, %c0_26] : memref<64x128xbf16, #tpu.memory_space<vmem>>, vector<64x128xbf16>
    %cst_27 = arith.constant dense<0.000000e+00> : vector<8x128xf32>
    %94 = tpu.matmul %87, %93, %cst_27 {dimension_numbers = #tpu.dot_dimension_numbers<[1], [0], [0], [1], [0, 0, 1, 1], [], []>} : vector<8x64xbf16>, vector<64x128xbf16>, vector<8x128xf32> -> vector<8x128xf32>
    %95 = arith.truncf %90 : vector<8x32xf32> to vector<8x32xbf16>
    %c0_28 = arith.constant 0 : index
    %c0_29 = arith.constant 0 : index
    %c0_30 = arith.constant 0 : index
    %96 = vector.load %arg3[%c0_28, %c0_29, %c0_30] : memref<4x32x128xbf16, #tpu.memory_space<vmem>>, vector<1x32x128xbf16>
    %97 = vector.shape_cast %96 : vector<1x32x128xbf16> to vector<32x128xbf16>
    %cst_31 = arith.constant dense<0.000000e+00> : vector<8x128xf32>
    %98 = tpu.matmul %95, %97, %cst_31 {dimension_numbers = #tpu.dot_dimension_numbers<[1], [0], [0], [1], [0, 0, 1, 1], [], []>} : vector<8x32xbf16>, vector<32x128xbf16>, vector<8x128xf32> -> vector<8x128xf32>
    %99 = arith.addf %94, %98 : vector<8x128xf32>
    %100 = vector.extract_strided_slice %88 {offsets = [0, 0], sizes = [1, 128], strides = [1, 1]} : vector<3x128xf32> to vector<1x128xf32>
    %101 = vector.broadcast %100 : vector<1x128xf32> to vector<8x128xf32>
    %102 = arith.addf %99, %101 : vector<8x128xf32>
    %103 = arith.negf %102 : vector<8x128xf32>
    %104 = math.exp %103 : vector<8x128xf32>
    %cst_32 = arith.constant 1.000000e+00 : f32
    %105 = vector.broadcast %cst_32 : f32 to vector<8x128xf32>
    %106 = arith.addf %105, %104 : vector<8x128xf32>
    %107 = arith.divf %105, %106 : vector<8x128xf32>
    %108 = math.tanh %102 : vector<8x128xf32>
    %109 = vector.extract_strided_slice %107 {offsets = [0, 0], sizes = [8, 32], strides = [1, 1]} : vector<8x128xf32> to vector<8x32xf32>
    %110 = vector.extract_strided_slice %107 {offsets = [0, 32], sizes = [8, 32], strides = [1, 1]} : vector<8x128xf32> to vector<8x32xf32>
    %111 = vector.extract_strided_slice %108 {offsets = [0, 64], sizes = [8, 32], strides = [1, 1]} : vector<8x128xf32> to vector<8x32xf32>
    %112 = vector.extract_strided_slice %107 {offsets = [0, 96], sizes = [8, 32], strides = [1, 1]} : vector<8x128xf32> to vector<8x32xf32>
    %113 = arith.mulf %110, %92 : vector<8x32xf32>
    %114 = arith.mulf %109, %111 : vector<8x32xf32>
    %115 = arith.addf %113, %114 : vector<8x32xf32>
    %116 = math.tanh %115 : vector<8x32xf32>
    %117 = arith.mulf %112, %116 : vector<8x32xf32>
    %c1 = arith.constant 1 : index
    %c0_33 = arith.constant 0 : index
    %c0_34 = arith.constant 0 : index
    %118 = vector.load %arg10[%c1, %c0_33, %c0_34] : memref<2x8x32xf32, #tpu.memory_space<vmem>>, vector<1x8x32xf32>
    %119 = vector.shape_cast %118 : vector<1x8x32xf32> to vector<8x32xf32>
    %c1_35 = arith.constant 1 : index
    %c0_36 = arith.constant 0 : index
    %c0_37 = arith.constant 0 : index
    %120 = vector.load %arg11[%c1_35, %c0_36, %c0_37] : memref<2x8x32xf32, #tpu.memory_space<vmem>>, vector<1x8x32xf32>
    %121 = vector.shape_cast %120 : vector<1x8x32xf32> to vector<8x32xf32>
    %122 = arith.truncf %117 : vector<8x32xf32> to vector<8x32xbf16>
    %c1_38 = arith.constant 1 : index
    %c0_39 = arith.constant 0 : index
    %c0_40 = arith.constant 0 : index
    %123 = vector.load %arg3[%c1_38, %c0_39, %c0_40] : memref<4x32x128xbf16, #tpu.memory_space<vmem>>, vector<1x32x128xbf16>
    %124 = vector.shape_cast %123 : vector<1x32x128xbf16> to vector<32x128xbf16>
    %cst_41 = arith.constant dense<0.000000e+00> : vector<8x128xf32>
    %125 = tpu.matmul %122, %124, %cst_41 {dimension_numbers = #tpu.dot_dimension_numbers<[1], [0], [0], [1], [0, 0, 1, 1], [], []>} : vector<8x32xbf16>, vector<32x128xbf16>, vector<8x128xf32> -> vector<8x128xf32>
    %126 = arith.truncf %119 : vector<8x32xf32> to vector<8x32xbf16>
    %c2 = arith.constant 2 : index
    %c0_42 = arith.constant 0 : index
    %c0_43 = arith.constant 0 : index
    %127 = vector.load %arg3[%c2, %c0_42, %c0_43] : memref<4x32x128xbf16, #tpu.memory_space<vmem>>, vector<1x32x128xbf16>
    %128 = vector.shape_cast %127 : vector<1x32x128xbf16> to vector<32x128xbf16>
    %cst_44 = arith.constant dense<0.000000e+00> : vector<8x128xf32>
    %129 = tpu.matmul %126, %128, %cst_44 {dimension_numbers = #tpu.dot_dimension_numbers<[1], [0], [0], [1], [0, 0, 1, 1], [], []>} : vector<8x32xbf16>, vector<32x128xbf16>, vector<8x128xf32> -> vector<8x128xf32>
    %130 = arith.addf %125, %129 : vector<8x128xf32>
    %131 = vector.extract_strided_slice %88 {offsets = [1, 0], sizes = [1, 128], strides = [1, 1]} : vector<3x128xf32> to vector<1x128xf32>
    %132 = vector.broadcast %131 : vector<1x128xf32> to vector<8x128xf32>
    %133 = arith.addf %130, %132 : vector<8x128xf32>
    %134 = arith.negf %133 : vector<8x128xf32>
    %135 = math.exp %134 : vector<8x128xf32>
    %cst_45 = arith.constant 1.000000e+00 : f32
    %136 = vector.broadcast %cst_45 : f32 to vector<8x128xf32>
    %137 = arith.addf %136, %135 : vector<8x128xf32>
    %138 = arith.divf %136, %137 : vector<8x128xf32>
    %139 = math.tanh %133 : vector<8x128xf32>
    %140 = vector.extract_strided_slice %138 {offsets = [0, 0], sizes = [8, 32], strides = [1, 1]} : vector<8x128xf32> to vector<8x32xf32>
    %141 = vector.extract_strided_slice %138 {offsets = [0, 32], sizes = [8, 32], strides = [1, 1]} : vector<8x128xf32> to vector<8x32xf32>
    %142 = vector.extract_strided_slice %139 {offsets = [0, 64], sizes = [8, 32], strides = [1, 1]} : vector<8x128xf32> to vector<8x32xf32>
    %143 = vector.extract_strided_slice %138 {offsets = [0, 96], sizes = [8, 32], strides = [1, 1]} : vector<8x128xf32> to vector<8x32xf32>
    %144 = arith.mulf %141, %121 : vector<8x32xf32>
    %145 = arith.mulf %140, %142 : vector<8x32xf32>
    %146 = arith.addf %144, %145 : vector<8x32xf32>
    %147 = math.tanh %146 : vector<8x32xf32>
    %148 = arith.mulf %143, %147 : vector<8x32xf32>
    %c0_46 = arith.constant 0 : index
    %c0_47 = arith.constant 0 : index
    %c0_48 = arith.constant 0 : index
    %149 = vector.load %arg10[%c0_46, %c0_47, %c0_48] : memref<2x8x32xf32, #tpu.memory_space<vmem>>, vector<1x8x32xf32>
    %150 = vector.shape_cast %149 : vector<1x8x32xf32> to vector<8x32xf32>
    %151 = vector.shape_cast %117 : vector<8x32xf32> to vector<1x8x32xf32>
    tpu.vector_store %arg10[%c0_46, %c0_47, %c0_48], %151 {strides = array<i32>} : memref<2x8x32xf32, #tpu.memory_space<vmem>>, vector<1x8x32xf32>,
    %c1_49 = arith.constant 1 : index
    %c0_50 = arith.constant 0 : index
    %c0_51 = arith.constant 0 : index
    %152 = vector.load %arg10[%c1_49, %c0_50, %c0_51] : memref<2x8x32xf32, #tpu.memory_space<vmem>>, vector<1x8x32xf32>
    %153 = vector.shape_cast %152 : vector<1x8x32xf32> to vector<8x32xf32>
    %154 = vector.shape_cast %148 : vector<8x32xf32> to vector<1x8x32xf32>
    tpu.vector_store %arg10[%c1_49, %c0_50, %c0_51], %154 {strides = array<i32>} : memref<2x8x32xf32, #tpu.memory_space<vmem>>, vector<1x8x32xf32>,
    %c0_52 = arith.constant 0 : index
    %c0_53 = arith.constant 0 : index
    %c0_54 = arith.constant 0 : index
    %155 = vector.load %arg11[%c0_52, %c0_53, %c0_54] : memref<2x8x32xf32, #tpu.memory_space<vmem>>, vector<1x8x32xf32>
    %156 = vector.shape_cast %155 : vector<1x8x32xf32> to vector<8x32xf32>
    %157 = vector.shape_cast %115 : vector<8x32xf32> to vector<1x8x32xf32>
    tpu.vector_store %arg11[%c0_52, %c0_53, %c0_54], %157 {strides = array<i32>} : memref<2x8x32xf32, #tpu.memory_space<vmem>>, vector<1x8x32xf32>,
    %c1_55 = arith.constant 1 : index
    %c0_56 = arith.constant 0 : index
    %c0_57 = arith.constant 0 : index
    %158 = vector.load %arg11[%c1_55, %c0_56, %c0_57] : memref<2x8x32xf32, #tpu.memory_space<vmem>>, vector<1x8x32xf32>
    %159 = vector.shape_cast %158 : vector<1x8x32xf32> to vector<8x32xf32>
    %160 = vector.shape_cast %146 : vector<8x32xf32> to vector<1x8x32xf32>
    tpu.vector_store %arg11[%c1_55, %c0_56, %c0_57], %160 {strides = array<i32>} : memref<2x8x32xf32, #tpu.memory_space<vmem>>, vector<1x8x32xf32>,
    %161 = arith.truncf %148 : vector<8x32xf32> to vector<8x32xbf16>
    %c3 = arith.constant 3 : index
    %c0_58 = arith.constant 0 : index
    %c0_59 = arith.constant 0 : index
    %162 = vector.load %arg3[%c3, %c0_58, %c0_59] : memref<4x32x128xbf16, #tpu.memory_space<vmem>>, vector<1x32x128xbf16>
    %163 = vector.shape_cast %162 : vector<1x32x128xbf16> to vector<32x128xbf16>
    %cst_60 = arith.constant dense<0.000000e+00> : vector<8x128xf32>
    %164 = tpu.matmul %161, %163, %cst_60 {dimension_numbers = #tpu.dot_dimension_numbers<[1], [0], [0], [1], [0, 0, 1, 1], [], []>} : vector<8x32xbf16>, vector<32x128xbf16>, vector<8x128xf32> -> vector<8x128xf32>
    %165 = vector.extract_strided_slice %88 {offsets = [2, 0], sizes = [1, 128], strides = [1, 1]} : vector<3x128xf32> to vector<1x128xf32>
    %166 = vector.broadcast %165 : vector<1x128xf32> to vector<8x128xf32>
    %167 = arith.addf %164, %166 : vector<8x128xf32>
    %c0_61 = arith.constant 0 : index
    %c0_62 = arith.constant 0 : index
    %c0_63 = arith.constant 0 : index
    %168 = vector.load %arg7[%c0_61, %c0_62, %c0_63] : memref<1x8x128xf32, #tpu.memory_space<vmem>>, vector<1x8x128xf32>
    %169 = vector.shape_cast %168 : vector<1x8x128xf32> to vector<8x128xf32>
    %170 = vector.shape_cast %167 : vector<8x128xf32> to vector<1x8x128xf32>
    tpu.vector_store %arg7[%c0_61, %c0_62, %c0_63], %170 {strides = array<i32>} : memref<1x8x128xf32, #tpu.memory_space<vmem>>, vector<1x8x128xf32>,
    %c0_i32_64 = arith.constant 0 : i32
    %171 = arith.cmpi eq, %arg0, %c0_i32_64 : i32
    %172 = arith.extui %171 : i1 to i32
    %c0_i32_65 = arith.constant 0 : i32
    %173 = arith.cmpi ne, %172, %c0_i32_65 : i32
    scf.if %173 {
      %c0_66 = arith.constant 0 : index
      %c0_67 = arith.constant 0 : index
      %c0_68 = arith.constant 0 : index
      %174 = vector.load %arg10[%c0_66, %c0_67, %c0_68] : memref<2x8x32xf32, #tpu.memory_space<vmem>>, vector<2x8x32xf32>
      %c0_69 = arith.constant 0 : index
      %c0_70 = arith.constant 0 : index
      %c0_71 = arith.constant 0 : index
      %175 = vector.load %arg8[%c0_69, %c0_70, %c0_71] : memref<2x8x32xf32, #tpu.memory_space<vmem>>, vector<2x8x32xf32>
      tpu.vector_store %arg8[%c0_69, %c0_70, %c0_71], %174 {strides = array<i32>} : memref<2x8x32xf32, #tpu.memory_space<vmem>>, vector<2x8x32xf32>,
      %c0_72 = arith.constant 0 : index
      %c0_73 = arith.constant 0 : index
      %c0_74 = arith.constant 0 : index
      %176 = vector.load %arg11[%c0_72, %c0_73, %c0_74] : memref<2x8x32xf32, #tpu.memory_space<vmem>>, vector<2x8x32xf32>
      %c0_75 = arith.constant 0 : index
      %c0_76 = arith.constant 0 : index
      %c0_77 = arith.constant 0 : index
      %177 = vector.load %arg9[%c0_75, %c0_76, %c0_77] : memref<2x8x32xf32, #tpu.memory_space<vmem>>, vector<2x8x32xf32>
      tpu.vector_store %arg9[%c0_75, %c0_76, %c0_77], %176 {strides = array<i32>} : memref<2x8x32xf32, #tpu.memory_space<vmem>>, vector<2x8x32xf32>,
    } else {
    }
    return
  }
  func.func @transform_0(%arg0: i32, %arg1: memref<8xi32, #tpu.memory_space<smem>>) -> (i32, i32) {
    %c0_i32 = arith.constant 0 : i32
    %c0_i32_0 = arith.constant 0 : i32
    %c0_i32_1 = arith.constant 0 : i32
    return %c0_i32, %c0_i32_0 : i32, i32
  }
  func.func @transform_1(%arg0: i32, %arg1: memref<8xi32, #tpu.memory_space<smem>>) -> (i32, i32, i32) {
    %c0_i32 = arith.constant 0 : i32
    %c0_i32_0 = arith.constant 0 : i32
    %c0_i32_1 = arith.constant 0 : i32
    %c0_i32_2 = arith.constant 0 : i32
    return %c0_i32, %c0_i32_0, %c0_i32_1 : i32, i32, i32
  }
  func.func @transform_2(%arg0: i32, %arg1: memref<8xi32, #tpu.memory_space<smem>>) -> (i32, i32) {
    %c0_i32 = arith.constant 0 : i32
    %c0_i32_0 = arith.constant 0 : i32
    %c0_i32_1 = arith.constant 0 : i32
    return %c0_i32, %c0_i32_0 : i32, i32
  }
  func.func @transform_3(%arg0: i32, %arg1: memref<8xi32, #tpu.memory_space<smem>>) -> (i32, i32, i32) {
    %c0_i32 = arith.constant 0 : i32
    %c0_i32_0 = arith.constant 0 : i32
    %c0_i32_1 = arith.constant 0 : i32
    %c0_i32_2 = arith.constant 0 : i32
    return %c0_i32, %c0_i32_0, %c0_i32_1 : i32, i32, i32
  }
  func.func @transform_4(%arg0: i32, %arg1: memref<8xi32, #tpu.memory_space<smem>>) -> (i32, i32, i32) {
    %c0_i32 = arith.constant 0 : i32
    %c0_i32_0 = arith.constant 0 : i32
    %c0_i32_1 = arith.constant 0 : i32
    %c0_i32_2 = arith.constant 0 : i32
    return %c0_i32, %c0_i32_0, %c0_i32_1 : i32, i32, i32
  }
  func.func @transform_5(%arg0: i32, %arg1: memref<8xi32, #tpu.memory_space<smem>>) -> (i32, i32, i32) {
    %c0_i32 = arith.constant 0 : i32
    %c0_i32_0 = arith.constant 0 : i32
    %c0_i32_1 = arith.constant 0 : i32
    return %arg0, %c0_i32, %c0_i32_0 : i32, i32, i32
  }
  func.func @transform_6(%arg0: i32, %arg1: memref<8xi32, #tpu.memory_space<smem>>) -> (i32, i32, i32) {
    %c0_i32 = arith.constant 0 : i32
    %c0_i32_0 = arith.constant 0 : i32
    %c0_i32_1 = arith.constant 0 : i32
    %c0_i32_2 = arith.constant 0 : i32
    return %c0_i32, %c0_i32_0, %c0_i32_1 : i32, i32, i32
  }
  func.func @transform_7(%arg0: i32, %arg1: memref<8xi32, #tpu.memory_space<smem>>) -> (i32, i32, i32) {
    %c0_i32 = arith.constant 0 : i32
    %c0_i32_0 = arith.constant 0 : i32
    %c0_i32_1 = arith.constant 0 : i32
    %c0_i32_2 = arith.constant 0 : i32
    return %c0_i32, %c0_i32_0, %c0_i32_1 : i32, i32, i32
  }
}

</mosaic_0001>

<llo_original>
// kernel: decoder_forward.1
$region0: #{decoder_forward.1}
  #allocation0 [shape = 'u32[]', space=smem, size = 0x4, offset = 0x4, fixed_abs, tag = 'smem constant byte address 0x4 - core index']
  #allocation1 [shape = 'u32[144,128]{1,0:T(1,128)}', space=vmem, size = 0x12000, scoped, tag = 'internal scratch']
  #allocation2 [shape = 'f32[2,8,32]{2,1,0:T(8,128)}', space=vmem, size = 0x2000, scoped, tag = 'scratch operand']
  #allocation3 [shape = 'f32[2,8,32]{2,1,0:T(8,128)}', space=vmem, size = 0x2000, scoped, tag = 'scratch operand']
  #allocation4 [shape = 's32[1]{0}', space=sflag, size = 0x4, scoped, tag = 'scoped memory for decoder_forward.1']
  #allocation5 [shape = 'u8[512]{0}', space=smem, size = 0x200, scoped, tag = 'prefetched SMEM operand 0']
  %s0 = inlined_call_operand.hbm [shape: s32[8], index: 0, kind: input, shape index: {}]
  %s1 = inlined_call_operand.hbm [shape: bf16[64,128], index: 1, kind: input, shape index: {}]
  %s2 = inlined_call_operand.hbm [shape: bf16[4,32,128], index: 2, kind: input, shape index: {}]
  %s3 = inlined_call_operand.vmem [shape: f32[3,128], index: 3, kind: input, shape index: {}]
  %s4 = inlined_call_operand.hbm [shape: f32[2,8,32], index: 4, kind: input, shape index: {}]
  %s5 = inlined_call_operand.hbm [shape: f32[2,8,32], index: 5, kind: input, shape index: {}]
  %s6 = inlined_call_operand.vmem [shape: f32[1,8,128], index: 6, kind: output, shape index: {0}]
  %s7 = inlined_call_operand.hbm [shape: f32[2,8,32], index: 7, kind: output, shape index: {1}]
  %s8 = inlined_call_operand.hbm [shape: f32[2,8,32], index: 8, kind: output, shape index: {2}]
  %9 = xla_tuple %s6, %s7, %s8
  %s10 = sld [smem:[#allocation0]]
  $region70: #{decoder_forward.1} parent=0
    _
  %s12 = ssub.s32 1, %s10
  %s13 = scalar_select 0, %s12, %s10
  %15 = dma.hbm_to_smem %s0, 16, [#allocation5], [#allocation4]
  %16 = dma.done [#allocation4], 16
  %17 = sfence
  $region1: #{decoder_forward.1} parent=0
    #allocation6 [shape = 'u8[16384]{0}', space=vmem, size = 0x4000, scoped, tag = 'input window, operand 1, single buffered']
    #allocation7 [shape = 's32[1]{0}', space=sflag, size = 0x4, scoped, tag = 'scoped memory for decoder_forward.1']
    #allocation8 [shape = 's32[1]{0}', space=sflag, size = 0x4, scoped, tag = 'scoped memory for decoder_forward.1']
    #allocation9 [shape = 'u8[32768]{0}', space=vmem, size = 0x8000, scoped, tag = 'input window, operand 2, single buffered']
    #allocation10 [shape = 's32[1]{0}', space=sflag, size = 0x4, scoped, tag = 'scoped memory for decoder_forward.1']
    #allocation11 [shape = 'u8[8192]{0}', space=vmem, size = 0x2000, scoped, tag = 'input window, operand 4, single buffered']
    #allocation12 [shape = 'u8[8192]{0}', space=vmem, size = 0x2000, scoped, tag = 'input window, operand 5, single buffered']
    #allocation13 [shape = 's32[1]{0}', space=sflag, size = 0x4, scoped, tag = 'scoped memory for decoder_forward.1']
    #allocation14 [shape = 'u8[8192]{0}', space=vmem, size = 0x2000, scoped, tag = 'output window, operand 1, single buffered']
    #allocation15 [shape = 'u8[8192]{0}', space=vmem, size = 0x2000, scoped, tag = 'output window, operand 2, single buffered']
    #allocation16 [shape = 's32[1]{0}', space=sflag, size = 0x4, scoped, tag = 'scoped memory for decoder_forward.1']
    %18 = vsyncpa [#allocation7], 0
    %19 = vsyncpa [#allocation10], 0
    %20 = vsyncpa [#allocation13], 0
    %21 = vsyncpa [#allocation8], 0
    %22 = vsyncpa [#allocation16], 0
    // Predicated region
    $region2: #{decoder_forward.1} parent=1 // pred_check
      _
    $region3: #{decoder_forward.1} parent=1 // pred_check_branch
      %24 = sbr.rel (0) target = $region5
    $region4: #{decoder_forward.1} parent=1 // pred_region
      %s26 = ssub.s32 512, 512
      %27 = vsyncadd [#allocation7], %s26
      %s28 = sshll.u32 [#allocation6], 4
      %s29 = int_to_ptr.vmem [resolvable:$true] %s28
      %34 = dma.hbm_to_vmem [thread:$0]  %s1, 512, %s29, [#allocation7], 64, 64, 4
    $region5: #{decoder_forward.1} parent=1 // pred_fallthru
      _
    // Predicated region
    $region6: #{decoder_forward.1} parent=1 // pred_check
      _
    $region7: #{decoder_forward.1} parent=1 // pred_check_branch
      %36 = sbr.rel (0) target = $region9
    $region8: #{decoder_forward.1} parent=1 // pred_region
      %s38 = ssub.s32 1024, 1024
      %39 = vsyncadd [#allocation10], %s38
      %s40 = sshll.u32 [#allocation9], 4
      %s41 = int_to_ptr.vmem [resolvable:$true] %s40
      %46 = dma.hbm_to_vmem [thread:$0]  %s2, 1024, %s41, [#allocation10], 64, 64, 4
    $region9: #{decoder_forward.1} parent=1 // pred_fallthru
      _
    // Predicated region
    $region10: #{decoder_forward.1} parent=1 // pred_check
      _
    $region11: #{decoder_forward.1} parent=1 // pred_check_branch
      %48 = sbr.rel (0) target = $region13
    $region12: #{decoder_forward.1} parent=1 // pred_region
      _
    $region13: #{decoder_forward.1} parent=1 // pred_fallthru
      _
    // Predicated region
    $region14: #{decoder_forward.1} parent=1 // pred_check
      _
    $region15: #{decoder_forward.1} parent=1 // pred_check_branch
      %50 = sbr.rel (0) target = $region17
    $region16: #{decoder_forward.1} parent=1 // pred_region
      %s52 = ssub.s32 256, 256
      %53 = vsyncadd [#allocation10], %s52
      %s54 = sshll.u32 [#allocation11], 4
      %s55 = int_to_ptr.vmem [resolvable:$true] %s54
      %60 = dma.hbm_to_vmem [thread:$0]  %s4, 256, %s55, [#allocation10], 128, 128, 8
    $region17: #{decoder_forward.1} parent=1 // pred_fallthru
      _
    // Predicated region
    $region18: #{decoder_forward.1} parent=1 // pred_check
      _
    $region19: #{decoder_forward.1} parent=1 // pred_check_branch
      %62 = sbr.rel (0) target = $region21
    $region20: #{decoder_forward.1} parent=1 // pred_region
      %s64 = ssub.s32 256, 256
      %65 = vsyncadd [#allocation13], %s64
      %s66 = sshll.u32 [#allocation12], 4
      %s67 = int_to_ptr.vmem [resolvable:$true] %s66
      %72 = dma.hbm_to_vmem [thread:$0]  %s5, 256, %s67, [#allocation13], 128, 128, 8
    $region21: #{decoder_forward.1} parent=1 // pred_fallthru
      _
    // Predicated region
    $region22: #{decoder_forward.1} parent=1 // pred_check
      _
    $region23: #{decoder_forward.1} parent=1 // pred_check_branch
      %74 = sbr.rel (0) target = $region25
    $region24: #{decoder_forward.1} parent=1 // pred_region
      %75 = dma.done [#allocation7], 512
    $region25: #{decoder_forward.1} parent=1 // pred_fallthru
      _
    // Predicated region
    $region26: #{decoder_forward.1} parent=1 // pred_check
      _
    $region27: #{decoder_forward.1} parent=1 // pred_check_branch
      %77 = sbr.rel (0) target = $region29
    $region28: #{decoder_forward.1} parent=1 // pred_region
      %78 = dma.done [#allocation10], 1024
    $region29: #{decoder_forward.1} parent=1 // pred_fallthru
      _
    // Predicated region
    $region30: #{decoder_forward.1} parent=1 // pred_check
      _
    $region31: #{decoder_forward.1} parent=1 // pred_check_branch
      %80 = sbr.rel (0) target = $region33
    $region32: #{decoder_forward.1} parent=1 // pred_region
      %81 = dma.done [#allocation10], 256
    $region33: #{decoder_forward.1} parent=1 // pred_fallthru
      _
    // Predicated region
    $region34: #{decoder_forward.1} parent=1 // pred_check
      _
    $region35: #{decoder_forward.1} parent=1 // pred_check_branch
      %83 = sbr.rel (0) target = $region37
    $region36: #{decoder_forward.1} parent=1 // pred_region
      %84 = dma.done [#allocation13], 256
    $region37: #{decoder_forward.1} parent=1 // pred_fallthru
      _
    %p86 = scmp.eq.s32.totalorder 0, 0
    // Predicated region
    $region38: #{decoder_forward.1} parent=1 // pred_check
      %p87 = pneg %p86
    $region39: #{decoder_forward.1} parent=1 // pred_check_branch
      %89 = sbr.rel (%p87) target = $region41
    $region40: #{decoder_forward.1} parent=1 // pred_region
      %v90 = vld [vmem:[#allocation11] sm:$0xff]
      %v91 = vld [vmem:[#allocation11 + $0x8] sm:$0xff]
      %vm92 = vcmask 261120
      %93 = vst.msk [vmem:[#allocation2] sm:$0xff] %vm92, %v90
      %94 = vst.msk [vmem:[#allocation2 + $0x8] sm:$0xff] %vm92, %v91
      %v95 = vld [vmem:[#allocation12] sm:$0xff]
      %v96 = vld [vmem:[#allocation12 + $0x8] sm:$0xff]
      %97 = vst.msk [vmem:[#allocation3] sm:$0xff] %vm92, %v95
      %98 = vst.msk [vmem:[#allocation3 + $0x8] sm:$0xff] %vm92, %v96
    $region41: #{decoder_forward.1} parent=1 // pred_fallthru
      _
    %s99 = smul.u32 0, 8
    %v100 = vlaneseq
    %v101 = vshrl.u32 %v100, 7
    %v102 = vlaneseq
    %v103 = vand.u32 %v102, 127
    %s104 = sld [smem:[#allocation5 + %s99]]
    %vm105 = vcmp.eq.s32.totalorder %v101, 0
    %v106 = vstv %s104
    %vm107 = vcmp.eq.s32.totalorder %v103, %v106
    %vm108 = vmand %vm105, %vm107
    %v109 = vsel %vm108, 1.0, 0.0
    %s110 = sadd.s32 %s99, 1
    %s111 = sld [smem:[#allocation5 + %s110]]
    %vm112 = vcmp.eq.s32.totalorder %v101, 1
    %v113 = vstv %s111
    %vm114 = vcmp.eq.s32.totalorder %v103, %v113
    %vm115 = vmand %vm112, %vm114
    %v116 = vsel %vm115, 1.0, %v109
    %s117 = sadd.s32 %s99, 2
    %s118 = sld [smem:[#allocation5 + %s117]]
    %vm119 = vcmp.eq.s32.totalorder %v101, 2
    %v120 = vstv %s118
    %vm121 = vcmp.eq.s32.totalorder %v103, %v120
    %vm122 = vmand %vm119, %vm121
    %v123 = vsel %vm122, 1.0, %v116
    %s124 = sadd.s32 %s99, 3
    %s125 = sld [smem:[#allocation5 + %s124]]
    %vm126 = vcmp.eq.s32.totalorder %v101, 3
    %v127 = vstv %s125
    %vm128 = vcmp.eq.s32.totalorder %v103, %v127
    %vm129 = vmand %vm126, %vm128
    %v130 = vsel %vm129, 1.0, %v123
    %s131 = sadd.s32 %s99, 4
    %s132 = sld [smem:[#allocation5 + %s131]]
    %vm133 = vcmp.eq.s32.totalorder %v101, 4
    %v134 = vstv %s132
    %vm135 = vcmp.eq.s32.totalorder %v103, %v134
    %vm136 = vmand %vm133, %vm135
    %v137 = vsel %vm136, 1.0, %v130
    %s138 = sadd.s32 %s99, 5
    %s139 = sld [smem:[#allocation5 + %s138]]
    %vm140 = vcmp.eq.s32.totalorder %v101, 5
    %v141 = vstv %s139
    %vm142 = vcmp.eq.s32.totalorder %v103, %v141
    %vm143 = vmand %vm140, %vm142
    %v144 = vsel %vm143, 1.0, %v137
    %s145 = sadd.s32 %s99, 6
    %s146 = sld [smem:[#allocation5 + %s145]]
    %vm147 = vcmp.eq.s32.totalorder %v101, 6
    %v148 = vstv %s146
    %vm149 = vcmp.eq.s32.totalorder %v103, %v148
    %vm150 = vmand %vm147, %vm149
    %v151 = vsel %vm150, 1.0, %v144
    %s152 = sadd.s32 %s99, 7
    %s153 = sld [smem:[#allocation5 + %s152]]
    %vm154 = vcmp.eq.s32.totalorder %v101, 7
    %v155 = vstv %s153
    %vm156 = vcmp.eq.s32.totalorder %v103, %v155
    %vm157 = vmand %vm154, %vm156
    %v158 = vsel %vm157, 1.0, %v151
    %v159 = vpack.c.bf16 %v158, %v158
    %v160 = vld [vmem:[%s3] sm:$0x7]
    %v161 = vld [vmem:[#allocation2] sm:$0xff]
    %v162 = vld [vmem:[#allocation3] sm:$0xff]
    %v163 = vld [vmem:[#allocation6] sm:$0xf]
    %v164 = vld [vmem:[#allocation6 + $0x4] sm:$0xf]
    %v165 = vld [vmem:[#allocation6 + $0x8] sm:$0xf]
    %v166 = vld [vmem:[#allocation6 + $0xc] sm:$0xf]
    %v167 = vld [vmem:[#allocation6 + $0x10] sm:$0xf]
    %v168 = vld [vmem:[#allocation6 + $0x14] sm:$0xf]
    %v169 = vld [vmem:[#allocation6 + $0x18] sm:$0xf]
    %v170 = vld [vmem:[#allocation6 + $0x1c] sm:$0xf]
    %v171 = vpack.c.bf16 %v161, %v161
    %v172 = vld [vmem:[#allocation9] sm:$0xf]
    %v173 = vld [vmem:[#allocation9 + $0x4] sm:$0xf]
    %v174 = vld [vmem:[#allocation9 + $0x8] sm:$0xf]
    %v175 = vld [vmem:[#allocation9 + $0xc] sm:$0xf]
    %v180 = vunpack.c.l.b16 %v172
    %v181 = vunpack.c.l.b16 %v173
    %v182 = vunpack.c.l.b16 %v174
    %v183 = vunpack.c.l.b16 %v175
    %v184 = vpack.c.b16 %v181, %v180
    %v185 = vpack.c.b16 %v183, %v182
    %vm188 = vcmask 261120
    %v190 = vsel %vm188, %v171, 0
    %192 = vmatprep.subr.bf16.mxu0 0
    %193 = vmatpush1.bf16.msra.mxu0 %v184
    %194 = vmatprep.subr.bf16.mxu0 0
    %195 = vmatpush1.bf16.msra.mxu0 %v185
    %196 = vmatprep.subr.bf16.mxu0 0
    %197 = vmatpush1.bf16.msra.mxu0 0
    %198 = vmatprep.subr.bf16.mxu0 0
    %199 = vmatpush1.bf16.msra.mxu0 0
    %200 = vmatprep.subr.bf16.mxu0 0
    %201 = vmatpush1.bf16.msra.mxu0 0
    %202 = vmatprep.subr.bf16.mxu0 0
    %203 = vmatpush1.bf16.msra.mxu0 0
    %204 = vmatprep.subr.bf16.mxu0 0
    %205 = vmatpush1.bf16.msra.mxu0 0
    %206 = vmatprep.subr.bf16.mxu0 0
    %207 = vmatpush1.bf16.msra.mxu0 0
    %208 = vmatprep.subr.bf16.mxu0 0
    %209 = vmatpush1.bf16.msra.mxu0 0
    %210 = vmatprep.subr.bf16.mxu0 0
    %211 = vmatpush1.bf16.msra.mxu0 0
    %212 = vmatprep.subr.bf16.mxu0 0
    %213 = vmatpush1.bf16.msra.mxu0 0
    %214 = vmatprep.subr.bf16.mxu0 0
    %215 = vmatpush1.bf16.msra.mxu0 0
    %216 = vmatprep.subr.bf16.mxu0 0
    %217 = vmatpush1.bf16.msra.mxu0 0
    %218 = vmatprep.subr.bf16.mxu0 0
    %219 = vmatpush1.bf16.msra.mxu0 0
    %220 = vmatprep.subr.bf16.mxu0 0
    %221 = vmatpush1.bf16.msra.mxu0 0
    %222 = vmatprep.subr.bf16.mxu0 0
    %223 = vmatpush1.bf16.msra.mxu0 0
    %224 = vmatprep.mubr.bf16.mxu0 0
    %225 = vmatmul.mubr.bf16.gmra.mrb[0].mxu0 %v190
    %v226 = vpop.f32.mrb[0].mxu0
    %v227 = vadd.f32 0.0, %v226
    %v228 = vpop.f32.mrb[0].mxu0
    %v229 = vpop.f32.mrb[0].mxu0
    %v230 = vpop.f32.mrb[0].mxu0
    %231 = vdwg.mxu0
    %v240 = vunpack.c.l.b16 %v163
    %v241 = vunpack.c.l.b16 %v164
    %v242 = vunpack.c.l.b16 %v165
    %v243 = vunpack.c.l.b16 %v166
    %v244 = vunpack.c.l.b16 %v167
    %v245 = vunpack.c.l.b16 %v168
    %v246 = vunpack.c.l.b16 %v169
    %v247 = vunpack.c.l.b16 %v170
    %v248 = vpack.c.b16 %v241, %v240
    %v249 = vpack.c.b16 %v243, %v242
    %v250 = vpack.c.b16 %v245, %v244
    %v251 = vpack.c.b16 %v247, %v246
    %vm256 = vcmask 523264
    %v258 = vsel %vm256, %v159, 0
    %260 = vmatprep.subr.bf16.mxu0 0
    %261 = vmatpush1.bf16.msra.mxu0 %v248
    %262 = vmatprep.subr.bf16.mxu0 0
    %263 = vmatpush1.bf16.msra.mxu0 %v249
    %264 = vmatprep.subr.bf16.mxu0 0
    %265 = vmatpush1.bf16.msra.mxu0 %v250
    %266 = vmatprep.subr.bf16.mxu0 0
    %267 = vmatpush1.bf16.msra.mxu0 %v251
    %268 = vmatprep.subr.bf16.mxu0 0
    %269 = vmatpush1.bf16.msra.mxu0 0
    %270 = vmatprep.subr.bf16.mxu0 0
    %271 = vmatpush1.bf16.msra.mxu0 0
    %272 = vmatprep.subr.bf16.mxu0 0
    %273 = vmatpush1.bf16.msra.mxu0 0
    %274 = vmatprep.subr.bf16.mxu0 0
    %275 = vmatpush1.bf16.msra.mxu0 0
    %276 = vmatprep.subr.bf16.mxu0 0
    %277 = vmatpush1.bf16.msra.mxu0 0
    %278 = vmatprep.subr.bf16.mxu0 0
    %279 = vmatpush1.bf16.msra.mxu0 0
    %280 = vmatprep.subr.bf16.mxu0 0
    %281 = vmatpush1.bf16.msra.mxu0 0
    %282 = vmatprep.subr.bf16.mxu0 0
    %283 = vmatpush1.bf16.msra.mxu0 0
    %284 = vmatprep.subr.bf16.mxu0 0
    %285 = vmatpush1.bf16.msra.mxu0 0
    %286 = vmatprep.subr.bf16.mxu0 0
    %287 = vmatpush1.bf16.msra.mxu0 0
    %288 = vmatprep.subr.bf16.mxu0 0
    %289 = vmatpush1.bf16.msra.mxu0 0
    %290 = vmatprep.subr.bf16.mxu0 0
    %291 = vmatpush1.bf16.msra.mxu0 0
    %292 = vmatprep.mubr.bf16.mxu0 0
    %293 = vmatmul.mubr.bf16.gmra.mrb[0].mxu0 %v258
    %v294 = vpop.f32.mrb[0].mxu0
    %v295 = vadd.f32 %v227, %v294
    %v296 = vpop.f32.mrb[0].mxu0
    %v297 = vpop.f32.mrb[0].mxu0
    %v298 = vpop.f32.mrb[0].mxu0
    %299 = vdwg.mxu0
    %v300 = vlaneseq
    %v301 = vshrl.u32 %v300, 7
    %v302 = vsub.s32 0, %v301
    %v303 = vrot.slane %v160, %v302
    %v304 = vadd.f32 %v295, %v303
    %v305 = vxor.u32 %v304, 2147483648
    %v306 = vmul.f32 %v305, 1.442695
    %v307 = vpow.pop %v306
    %v308 = vadd.f32 %v307, 1.0
    %v309 = vrcp.pop %v308
    %v310 = vmul.f32 1.0, %v309
    %v311 = vtanh.pop %v304
    %313 = vrot.lane.b32.xlu0 %v162, 32
    %v314 = vpop.permute.xlu0 %313
    %v316 = vmul.f32 %v310, %v314
    %318 = vrot.lane.b32.xlu0 %v311, 64
    %v319 = vpop.permute.xlu0 %318
    %v321 = vmul.f32 %v310, %v319
    %323 = vrot.lane.b32.xlu0 %v321, 32
    %v324 = vpop.permute.xlu0 %323
    %v326 = vadd.f32 %v316, %v324
    %v327 = vtanh.pop %v326
    %329 = vrot.lane.b32.xlu0 %v327, 64
    %v330 = vpop.permute.xlu0 %329
    %v332 = vmul.f32 %v310, %v330
    %s333 = scalar_lea.vmem [#allocation2], 8
    %v334 = vld [vmem:[%s333] sm:$0xff]
    %s335 = scalar_lea.vmem [#allocation3], 8
    %v336 = vld [vmem:[%s335] sm:$0xff]
    %v337 = vpack.c.bf16 %v332, %v332
    %s338 = scalar_lea.vmem [#allocation9], 16
    %v339 = vld [vmem:[%s338] sm:$0xf]
    %v340 = vld [vmem:[%s338 + $0x4] sm:$0xf]
    %v341 = vld [vmem:[%s338 + $0x8] sm:$0xf]
    %v342 = vld [vmem:[%s338 + $0xc] sm:$0xf]
    %v343 = vpack.c.bf16 %v334, %v334
    %s344 = scalar_lea.vmem [#allocation9], 32
    %v345 = vld [vmem:[%s344] sm:$0xf]
    %v346 = vld [vmem:[%s344 + $0x4] sm:$0xf]
    %v347 = vld [vmem:[%s344 + $0x8] sm:$0xf]
    %v348 = vld [vmem:[%s344 + $0xc] sm:$0xf]
    %v353 = vunpack.c.l.b16 %v345
    %v354 = vunpack.c.l.b16 %v346
    %v355 = vunpack.c.l.b16 %v347
    %v356 = vunpack.c.l.b16 %v348
    %v357 = vpack.c.b16 %v354, %v353
    %v358 = vpack.c.b16 %v356, %v355
    %v362 = vsel %vm188, %v343, 0
    %364 = vmatprep.subr.bf16.mxu0 0
    %365 = vmatpush1.bf16.msra.mxu0 %v357
    %366 = vmatprep.subr.bf16.mxu0 0
    %367 = vmatpush1.bf16.msra.mxu0 %v358
    %368 = vmatprep.subr.bf16.mxu0 0
    %369 = vmatpush1.bf16.msra.mxu0 0
    %370 = vmatprep.subr.bf16.mxu0 0
    %371 = vmatpush1.bf16.msra.mxu0 0
    %372 = vmatprep.subr.bf16.mxu0 0
    %373 = vmatpush1.bf16.msra.mxu0 0
    %374 = vmatprep.subr.bf16.mxu0 0
    %375 = vmatpush1.bf16.msra.mxu0 0
    %376 = vmatprep.subr.bf16.mxu0 0
    %377 = vmatpush1.bf16.msra.mxu0 0
    %378 = vmatprep.subr.bf16.mxu0 0
    %379 = vmatpush1.bf16.msra.mxu0 0
    %380 = vmatprep.subr.bf16.mxu0 0
    %381 = vmatpush1.bf16.msra.mxu0 0
    %382 = vmatprep.subr.bf16.mxu0 0
    %383 = vmatpush1.bf16.msra.mxu0 0
    %384 = vmatprep.subr.bf16.mxu0 0
    %385 = vmatpush1.bf16.msra.mxu0 0
    %386 = vmatprep.subr.bf16.mxu0 0
    %387 = vmatpush1.bf16.msra.mxu0 0
    %388 = vmatprep.subr.bf16.mxu0 0
    %389 = vmatpush1.bf16.msra.mxu0 0
    %390 = vmatprep.subr.bf16.mxu0 0
    %391 = vmatpush1.bf16.msra.mxu0 0
    %392 = vmatprep.subr.bf16.mxu0 0
    %393 = vmatpush1.bf16.msra.mxu0 0
    %394 = vmatprep.subr.bf16.mxu0 0
    %395 = vmatpush1.bf16.msra.mxu0 0
    %396 = vmatprep.mubr.bf16.mxu0 0
    %397 = vmatmul.mubr.bf16.gmra.mrb[0].mxu0 %v362
    %v398 = vpop.f32.mrb[0].mxu0
    %v399 = vadd.f32 0.0, %v398
    %v400 = vpop.f32.mrb[0].mxu0
    %v401 = vpop.f32.mrb[0].mxu0
    %v402 = vpop.f32.mrb[0].mxu0
    %403 = vdwg.mxu0
    %405 = vrot.lane.b32.xlu0 %v337, 32
    %v406 = vpop.permute.xlu0 %405
    %v411 = vunpack.c.l.b16 %v339
    %v412 = vunpack.c.l.b16 %v340
    %v413 = vunpack.c.l.b16 %v341
    %v414 = vunpack.c.l.b16 %v342
    %v415 = vpack.c.b16 %v412, %v411
    %v416 = vpack.c.b16 %v414, %v413
    %v420 = vsel %vm188, %v406, 0
    %422 = vmatprep.subr.bf16.mxu0 0
    %423 = vmatpush1.bf16.msra.mxu0 %v415
    %424 = vmatprep.subr.bf16.mxu0 0
    %425 = vmatpush1.bf16.msra.mxu0 %v416
    %426 = vmatprep.subr.bf16.mxu0 0
    %427 = vmatpush1.bf16.msra.mxu0 0
    %428 = vmatprep.subr.bf16.mxu0 0
    %429 = vmatpush1.bf16.msra.mxu0 0
    %430 = vmatprep.subr.bf16.mxu0 0
    %431 = vmatpush1.bf16.msra.mxu0 0
    %432 = vmatprep.subr.bf16.mxu0 0
    %433 = vmatpush1.bf16.msra.mxu0 0
    %434 = vmatprep.subr.bf16.mxu0 0
    %435 = vmatpush1.bf16.msra.mxu0 0
    %436 = vmatprep.subr.bf16.mxu0 0
    %437 = vmatpush1.bf16.msra.mxu0 0
    %438 = vmatprep.subr.bf16.mxu0 0
    %439 = vmatpush1.bf16.msra.mxu0 0
    %440 = vmatprep.subr.bf16.mxu0 0
    %441 = vmatpush1.bf16.msra.mxu0 0
    %442 = vmatprep.subr.bf16.mxu0 0
    %443 = vmatpush1.bf16.msra.mxu0 0
    %444 = vmatprep.subr.bf16.mxu0 0
    %445 = vmatpush1.bf16.msra.mxu0 0
    %446 = vmatprep.subr.bf16.mxu0 0
    %447 = vmatpush1.bf16.msra.mxu0 0
    %448 = vmatprep.subr.bf16.mxu0 0
    %449 = vmatpush1.bf16.msra.mxu0 0
    %450 = vmatprep.subr.bf16.mxu0 0
    %451 = vmatpush1.bf16.msra.mxu0 0
    %452 = vmatprep.subr.bf16.mxu0 0
    %453 = vmatpush1.bf16.msra.mxu0 0
    %454 = vmatprep.mubr.bf16.mxu0 0
    %455 = vmatmul.mubr.bf16.gmra.mrb[0].mxu0 %v420
    %v456 = vpop.f32.mrb[0].mxu0
    %v457 = vadd.f32 %v399, %v456
    %v458 = vpop.f32.mrb[0].mxu0
    %v459 = vpop.f32.mrb[0].mxu0
    %v460 = vpop.f32.mrb[0].mxu0
    %461 = vdwg.mxu0
    %v462 = vlaneseq
    %v463 = vshrl.u32 %v462, 7
    %v464 = vsub.s32 1, %v463
    %v465 = vrot.slane %v160, %v464
    %v466 = vadd.f32 %v457, %v465
    %v467 = vxor.u32 %v466, 2147483648
    %v468 = vmul.f32 %v467, 1.442695
    %v469 = vpow.pop %v468
    %v470 = vadd.f32 %v469, 1.0
    %v471 = vrcp.pop %v470
    %v472 = vmul.f32 1.0, %v471
    %v473 = vtanh.pop %v466
    %475 = vrot.lane.b32.xlu0 %v336, 32
    %v476 = vpop.permute.xlu0 %475
    %v478 = vmul.f32 %v472, %v476
    %480 = vrot.lane.b32.xlu0 %v473, 64
    %v481 = vpop.permute.xlu0 %480
    %v483 = vmul.f32 %v472, %v481
    %485 = vrot.lane.b32.xlu0 %v483, 32
    %v486 = vpop.permute.xlu0 %485
    %v488 = vadd.f32 %v478, %v486
    %v489 = vtanh.pop %v488
    %491 = vrot.lane.b32.xlu0 %v489, 64
    %v492 = vpop.permute.xlu0 %491
    %v494 = vmul.f32 %v472, %v492
    %496 = vrot.lane.b32.xlu0 %v332, 32
    %v497 = vpop.permute.xlu0 %496
    %499 = vst.msk [vmem:[#allocation2] sm:$0xff] %vm188, %v497
    %501 = vrot.lane.b32.xlu0 %v494, 32
    %v502 = vpop.permute.xlu0 %501
    %504 = vst.msk [vmem:[%s333] sm:$0xff] %vm188, %v502
    %506 = vrot.lane.b32.xlu0 %v326, 96
    %v507 = vpop.permute.xlu0 %506
    %509 = vst.msk [vmem:[#allocation3] sm:$0xff] %vm188, %v507
    %511 = vrot.lane.b32.xlu0 %v488, 96
    %v512 = vpop.permute.xlu0 %511
    %514 = vst.msk [vmem:[%s335] sm:$0xff] %vm188, %v512
    %v515 = vpack.c.bf16 %v494, %v494
    %s516 = scalar_lea.vmem [#allocation9], 48
    %v517 = vld [vmem:[%s516] sm:$0xf]
    %v518 = vld [vmem:[%s516 + $0x4] sm:$0xf]
    %v519 = vld [vmem:[%s516 + $0x8] sm:$0xf]
    %v520 = vld [vmem:[%s516 + $0xc] sm:$0xf]
    %v521 = vlaneseq
    %v522 = vshrl.u32 %v521, 7
    %v523 = vsub.s32 2, %v522
    %v524 = vrot.slane %v160, %v523
    %526 = vrot.lane.b32.xlu0 %v515, 32
    %v527 = vpop.permute.xlu0 %526
    %v532 = vunpack.c.l.b16 %v517
    %v533 = vunpack.c.l.b16 %v518
    %v534 = vunpack.c.l.b16 %v519
    %v535 = vunpack.c.l.b16 %v520
    %v536 = vpack.c.b16 %v533, %v532
    %v537 = vpack.c.b16 %v535, %v534
    %v541 = vsel %vm188, %v527, 0
    %543 = vmatprep.subr.bf16.mxu0 0
    %544 = vmatpush1.bf16.msra.mxu0 %v536
    %545 = vmatprep.subr.bf16.mxu0 0
    %546 = vmatpush1.bf16.msra.mxu0 %v537
    %547 = vmatprep.subr.bf16.mxu0 0
    %548 = vmatpush1.bf16.msra.mxu0 0
    %549 = vmatprep.subr.bf16.mxu0 0
    %550 = vmatpush1.bf16.msra.mxu0 0
    %551 = vmatprep.subr.bf16.mxu0 0
    %552 = vmatpush1.bf16.msra.mxu0 0
    %553 = vmatprep.subr.bf16.mxu0 0
    %554 = vmatpush1.bf16.msra.mxu0 0
    %555 = vmatprep.subr.bf16.mxu0 0
    %556 = vmatpush1.bf16.msra.mxu0 0
    %557 = vmatprep.subr.bf16.mxu0 0
    %558 = vmatpush1.bf16.msra.mxu0 0
    %559 = vmatprep.subr.bf16.mxu0 0
    %560 = vmatpush1.bf16.msra.mxu0 0
    %561 = vmatprep.subr.bf16.mxu0 0
    %562 = vmatpush1.bf16.msra.mxu0 0
    %563 = vmatprep.subr.bf16.mxu0 0
    %564 = vmatpush1.bf16.msra.mxu0 0
    %565 = vmatprep.subr.bf16.mxu0 0
    %566 = vmatpush1.bf16.msra.mxu0 0
    %567 = vmatprep.subr.bf16.mxu0 0
    %568 = vmatpush1.bf16.msra.mxu0 0
    %569 = vmatprep.subr.bf16.mxu0 0
    %570 = vmatpush1.bf16.msra.mxu0 0
    %571 = vmatprep.subr.bf16.mxu0 0
    %572 = vmatpush1.bf16.msra.mxu0 0
    %573 = vmatprep.subr.bf16.mxu0 0
    %574 = vmatpush1.bf16.msra.mxu0 0
    %575 = vmatprep.mubr.bf16.mxu0 0
    %576 = vmatmul.mubr.bf16.gmra.mrb[0].mxu0 %v541
    %v577 = vpop.f32.mrb[0].mxu0
    %v578 = vadd.f32 %v524, %v577
    %v579 = vpop.f32.mrb[0].mxu0
    %v580 = vpop.f32.mrb[0].mxu0
    %v581 = vpop.f32.mrb[0].mxu0
    %582 = vdwg.mxu0
    %583 = vst [vmem:[%s6] sm:$0xff] %v578
    // Predicated region
    $region42: #{decoder_forward.1} parent=1 // pred_check
      %p584 = pneg %p86
    $region43: #{decoder_forward.1} parent=1 // pred_check_branch
      %586 = sbr.rel (%p584) target = $region45
    $region44: #{decoder_forward.1} parent=1 // pred_region
      %v587 = vld [vmem:[#allocation2] sm:$0xff]
      %v588 = vld [vmem:[#allocation2 + $0x8] sm:$0xff]
      %589 = vst.msk [vmem:[#allocation14] sm:$0xff] %vm188, %v587
      %590 = vst.msk [vmem:[#allocation14 + $0x8] sm:$0xff] %vm188, %v588
      %v591 = vld [vmem:[#allocation3] sm:$0xff]
      %v592 = vld [vmem:[#allocation3 + $0x8] sm:$0xff]
      %593 = vst.msk [vmem:[#allocation15] sm:$0xff] %vm188, %v591
      %594 = vst.msk [vmem:[#allocation15 + $0x8] sm:$0xff] %vm188, %v592
    $region45: #{decoder_forward.1} parent=1 // pred_fallthru
      _
    // Predicated region
    $region46: #{decoder_forward.1} parent=1 // pred_check
      _
    $region47: #{decoder_forward.1} parent=1 // pred_check_branch
      %596 = sbr.rel (0) target = $region49
    $region48: #{decoder_forward.1} parent=1 // pred_region
      _
    $region49: #{decoder_forward.1} parent=1 // pred_fallthru
      _
    // Predicated region
    $region50: #{decoder_forward.1} parent=1 // pred_check
      _
    $region51: #{decoder_forward.1} parent=1 // pred_check_branch
      %598 = sbr.rel (0) target = $region53
    $region52: #{decoder_forward.1} parent=1 // pred_region
      %s600 = ssub.s32 256, 256
      %601 = vsyncadd [#allocation8], %s600
      %s602 = sshll.u32 [#allocation14], 4
      %s603 = int_to_ptr.vmem [resolvable:$true] %s602
      %608 = dma.vmem_to_hbm [thread:$0]  %s603, 256, %s7, [#allocation8], 128, 128, 8
    $region53: #{decoder_forward.1} parent=1 // pred_fallthru
      _
    // Predicated region
    $region54: #{decoder_forward.1} parent=1 // pred_check
      _
    $region55: #{decoder_forward.1} parent=1 // pred_check_branch
      %610 = sbr.rel (0) target = $region57
    $region56: #{decoder_forward.1} parent=1 // pred_region
      %s612 = ssub.s32 256, 256
      %613 = vsyncadd [#allocation16], %s612
      %s614 = sshll.u32 [#allocation15], 4
      %s615 = int_to_ptr.vmem [resolvable:$true] %s614
      %620 = dma.vmem_to_hbm [thread:$0]  %s615, 256, %s8, [#allocation16], 128, 128, 8
    $region57: #{decoder_forward.1} parent=1 // pred_fallthru
      _
    // Predicated region
    $region58: #{decoder_forward.1} parent=1 // pred_check
      _
    $region59: #{decoder_forward.1} parent=1 // pred_check_branch
      %622 = sbr.rel (0) target = $region61
    $region60: #{decoder_forward.1} parent=1 // pred_region
      _
    $region61: #{decoder_forward.1} parent=1 // pred_fallthru
      _
    // Predicated region
    $region62: #{decoder_forward.1} parent=1 // pred_check
      _
    $region63: #{decoder_forward.1} parent=1 // pred_check_branch
      %624 = sbr.rel (0) target = $region65
    $region64: #{decoder_forward.1} parent=1 // pred_region
      %625 = dma.done [#allocation8], 256
    $region65: #{decoder_forward.1} parent=1 // pred_fallthru
      _
    // Predicated region
    $region66: #{decoder_forward.1} parent=1 // pred_check
      _
    $region67: #{decoder_forward.1} parent=1 // pred_check_branch
      %627 = sbr.rel (0) target = $region69
    $region68: #{decoder_forward.1} parent=1 // pred_region
      %628 = dma.done [#allocation16], 256
    $region69: #{decoder_forward.1} parent=1 // pred_fallthru
      _
    %629 = vsyncpa [#allocation7], 1
    %630 = vsyncpa [#allocation10], 1
    %631 = vsyncpa [#allocation13], 1
    %632 = vsyncpa [#allocation8], 1
    %633 = vsyncpa [#allocation16], 1

</llo_original>
